<compile_context>
chip_gen: v6e
topology: v6e:2x2x1
jax: 0.10.0
libtpu: 0.0.40
codegen_flags: <defaults>
</compile_context>

<pallas_src>
import jax
import jax.numpy as jnp
from jax import lax
from jax.experimental import pallas as pl
from jax.experimental.pallas import tpu as pltpu

_MIB = 1024 * 1024


def _round_up(x, m):
    return (x + m - 1) // m * m


def _vmem_capacity_bytes():
    try:
        return int(pltpu.get_tpu_info().vmem_capacity_bytes)
    except Exception:
        return 64 * _MIB  # conservative: v7x per-TensorCore VMEM


def prepare_feedforward_params(w1, b1, w2, b2, compute_dtype=jnp.bfloat16):
    """One-time weight preparation (call ONCE, outside the per-step hot path).

    Splits W1/b1 into the GEGLU value/gate halves and casts MXU operands to bf16 so the
    kernel never slices a [tm, 2*hidden] intermediate and never re-casts weights per call.
    """
    dim, two_hidden = w1.shape
    assert two_hidden % 2 == 0
    hidden = two_hidden // 2
    return dict(
        w1_u=w1[:, :hidden].astype(compute_dtype),
        w1_g=w1[:, hidden:].astype(compute_dtype),
        b1_u=b1[:hidden].reshape(1, hidden).astype(jnp.float32),
        b1_g=b1[hidden:].reshape(1, hidden).astype(jnp.float32),
        w2=w2.astype(compute_dtype),
        b2=b2.reshape(1, dim).astype(jnp.float32),
    )


def _ff_kernel(x_ref, w1u_ref, w1g_ref, b1u_ref, b1g_ref, w2_ref, b2_ref, o_ref):
    # x arrives f32 (no wrapper-side cast pass); cast to bf16 on the VPU before the MXU dots.
    x = x_ref[...].astype(w1u_ref.dtype)

    # First projection, split into value/gate halves (GEGLU chunk(2, dim=-1)); f32 accumulation.
    u = jnp.dot(x, w1u_ref[...], preferred_element_type=jnp.float32) + b1u_ref[...]
    g = jnp.dot(x, w1g_ref[...], preferred_element_type=jnp.float32) + b1g_ref[...]

    # Exact GELU (erf form) matches torch.nn.functional.gelu default. Fused so u/g die before
    # the second dot; `a` is the only [tm, hidden] value live across it (bf16 MXU operand).
    a = (u * (0.5 * g * (1.0 + lax.erf(g * jnp.float32(0.7071067811865476))))).astype(w2_ref.dtype)

    # TODO(synk): nn.Dropout(p=0.2) is identity in eval mode; training-mode dropout would need
    #             pltpu.prng_seed / pltpu.prng_random_bits and is not implemented.

    # Second projection: [tm, hidden] @ [hidden, dim] -> [tm, dim] (bf16 operands, f32 accumulate).
    o_ref[...] = (jnp.dot(a, w2_ref[...], preferred_element_type=jnp.float32)
                  + b2_ref[...]).astype(o_ref.dtype)


def _choose_row_tile(n, tm):
    """Row tile: multiple of 8 (f32 sublane), and >= 2 grid steps when possible so the
    'parallel' grid axis shards rows across both v7x TensorCores."""
    tm_eff = min(tm, _round_up(max(n, 1), 8))
    if n > 8 and pl.cdiv(n, tm_eff) < 2:
        tm_eff = _round_up(pl.cdiv(n, 2), 8)
    return tm_eff


def _weight_spec(shape, mode):
    if mode is None:
        return pl.BlockSpec(shape, lambda i: (0, 0))
    return pl.BlockSpec(shape, lambda i: (0, 0), pipeline_mode=mode)


def _feedforward_call(x, params, *, tm, single_buffer_weights):
    n, dim = x.shape
    hidden = params["w1_u"].shape[1]
    out_dtype = x.dtype
    w_itemsize = jnp.dtype(params["w1_u"].dtype).itemsize

    tm_eff = _choose_row_tile(n, tm)
    grid = (pl.cdiv(n, tm_eff),)  # ragged last block is masked by Pallas -> no jnp.pad, no wasted rows

    # Grid-invariant weights don't benefit from double-buffering; Buffered(1) halves their VMEM.
    wmode = pl.Buffered(1) if single_buffer_weights else None
    n_wbuf = 1 if single_buffer_weights else 2

    # VMEM budget (generation-aware): weights (single- or double-buffered) + double-buffered x/out
    # tiles + f32 u/g, bf16 a, f32 pre-cast out intermediates, with headroom below physical VMEM.
    cap = _vmem_capacity_bytes()
    weight_bytes = n_wbuf * ((2 * dim * hidden + hidden * dim) * w_itemsize + (2 * hidden + dim) * 4)
    io_bytes = 2 * tm_eff * dim * (jnp.dtype(x.dtype).itemsize + jnp.dtype(out_dtype).itemsize)
    interm_bytes = tm_eff * hidden * (4 + 4 + w_itemsize) + tm_eff * dim * 4
    needed = weight_bytes + io_bytes + 2 * interm_bytes
    vmem_limit = int(min(cap - 8 * _MIB, max(needed + 4 * _MIB, 32 * _MIB)))
    vmem_limit = max(vmem_limit, 16 * _MIB)

    flops = 2 * n * (dim * 2 * hidden + hidden * dim)
    bytes_accessed = int(
        n * dim * jnp.dtype(x.dtype).itemsize                    # x (read once, f32)
        + 3 * dim * hidden * w_itemsize                          # W1 halves + W2 (bf16)
        + (2 * hidden + dim) * 4                                 # biases (f32)
        + n * dim * jnp.dtype(out_dtype).itemsize                # output
    )

    return pl.pallas_call(
        _ff_kernel,
        out_shape=jax.ShapeDtypeStruct((n, dim), out_dtype),
        grid_spec=pl.GridSpec(
            grid=grid,
            in_specs=[
                pl.BlockSpec((tm_eff, dim), lambda i: (i, 0)),           # x tile (f32, double-buffered)
                _weight_spec((dim, hidden), wmode),                      # W1 value half (resident)
                _weight_spec((dim, hidden), wmode),                      # W1 gate half (resident)
                _weight_spec((1, hidden), wmode),                        # b1 value half
                _weight_spec((1, hidden), wmode),                        # b1 gate half
                _weight_spec((hidden, dim), wmode),                      # W2 (resident)
                _weight_spec((1, dim), wmode),                           # b2
            ],
            out_specs=pl.BlockSpec((tm_eff, dim), lambda i: (i, 0)),
        ),
        compiler_params=pltpu.CompilerParams(
            dimension_semantics=("parallel",),
            vmem_limit_bytes=vmem_limit,
        ),
        cost_estimate=pl.CostEstimate(
            flops=flops,
            transcendentals=n * hidden,   # one erf per gate element
            bytes_accessed=bytes_accessed,
        ),
    )(x, params["w1_u"], params["w1_g"], params["b1_u"], params["b1_g"],
      params["w2"], params["b2"])


def feedforward_pallas(x, params, *, tm=256, single_buffer_weights=True):
    """x: [N, dim] (f32). params: output of prepare_feedforward_params(). On v5e, tm=128 is
    sufficient (128-deep MXU) and halves the f32 intermediate footprint."""
    try:
        return _feedforward_call(x, params, tm=tm, single_buffer_weights=single_buffer_weights)
    except Exception:
        if not single_buffer_weights:
            raise
        # pl.Buffered(1) not accepted on this jax version -> fall back to default double-buffering.
        return _feedforward_call(x, params, tm=tm, single_buffer_weights=False)


def feedforward_ref(x, w1, b1, w2, b2):
    h = x @ w1 + b1
    hidden = h.shape[-1] // 2
    u, g = h[:, :hidden], h[:, hidden:]
    a = u * jax.nn.gelu(g, approximate=False)
    return a @ w2 + b2


if __name__ == "__main__":
    # Module config: FeedForward(dim=32, mult=4) -> Linear(32, 256), GEGLU -> 128, Linear(128, 32)
    dim = 32
    mult = 4
    hidden = dim * mult              # 128
    batch, seq = 2, 8                # N = 16 tokens

    key = jax.random.PRNGKey(0)
    k_x, k_w1, k_b1, k_w2, k_b2 = jax.random.split(key, 5)

    x = jax.random.normal(k_x, (batch, seq, dim), dtype=jnp.float32)

    # Deterministic init mimicking torch.nn.Linear default: U(-1/sqrt(fan_in), 1/sqrt(fan_in)).
    bound1 = 1.0 / jnp.sqrt(jnp.float32(dim))
    w1 = jax.random.uniform(k_w1, (dim, 2 * hidden), jnp.float32, -bound1, bound1)
    b1 = jax.random.uniform(k_b1, (2 * hidden,), jnp.float32, -bound1, bound1)
    bound2 = 1.0 / jnp.sqrt(jnp.float32(hidden))
    w2 = jax.random.uniform(k_w2, (hidden, dim), jnp.float32, -bound2, bound2)
    b2 = jax.random.uniform(k_b2, (dim,), jnp.float32, -bound2, bound2)

    # One-time weight prep (split GEGLU halves, bf16 cast) -- outside the per-step hot path.
    params = prepare_feedforward_params(w1, b1, w2, b2)
    params = jax.block_until_ready(params)

    x_flat = x.reshape(batch * seq, dim)
    out = feedforward_pallas(x_flat, params)
    out = jax.block_until_ready(out).reshape(batch, seq, dim)

    ref = feedforward_ref(x_flat, w1, b1, w2, b2).reshape(batch, seq, dim)
    assert out.shape == (batch, seq, dim)
    # bf16 MXU operands -> looser tolerance than a pure-f32 implementation.
    assert jnp.allclose(out, ref, atol=2e-2, rtol=2e-2), "mismatch vs reference"

    print("KERNEL_OK")
</pallas_src>

<mosaic_0001>
module attributes {stable_mosaic.version = 11 : i64} {
  func.func @_ff_kernel(%arg0: i32, %arg1: memref<8x32xf32, #tpu.memory_space<vmem>>, %arg2: memref<32x128xbf16, #tpu.memory_space<vmem>>, %arg3: memref<32x128xbf16, #tpu.memory_space<vmem>>, %arg4: memref<1x128xf32, #tpu.memory_space<vmem>>, %arg5: memref<1x128xf32, #tpu.memory_space<vmem>>, %arg6: memref<128x32xbf16, #tpu.memory_space<vmem>>, %arg7: memref<1x32xf32, #tpu.memory_space<vmem>>, %arg8: memref<8x32xf32, #tpu.memory_space<vmem>>) attributes {dimension_semantics = [#tpu.dimension_semantics<parallel>], iteration_bounds = array<i64: 2>, scalar_prefetch = 0 : i64, scratch_operands = 0 : i64, tpu.core_type = #tpu.core_type<tc>, window_params = [{transform_indices = @transform_0, window_bounds = array<i64: 8, 32>}, {pipeline_mode = #tpu.pipeline_mode<synchronous>, transform_indices = @transform_1, window_bounds = array<i64: 32, 128>}, {pipeline_mode = #tpu.pipeline_mode<synchronous>, transform_indices = @transform_2, window_bounds = array<i64: 32, 128>}, {pipeline_mode = #tpu.pipeline_mode<synchronous>, transform_indices = @transform_3, window_bounds = array<i64: 1, 128>}, {pipeline_mode = #tpu.pipeline_mode<synchronous>, transform_indices = @transform_4, window_bounds = array<i64: 1, 128>}, {pipeline_mode = #tpu.pipeline_mode<synchronous>, transform_indices = @transform_5, window_bounds = array<i64: 128, 32>}, {pipeline_mode = #tpu.pipeline_mode<synchronous>, transform_indices = @transform_6, window_bounds = array<i64: 1, 32>}, {transform_indices = @transform_7, window_bounds = array<i64: 8, 32>}]} {
    %c0 = arith.constant 0 : index
    %c0_0 = arith.constant 0 : index
    %0 = vector.load %arg1[%c0, %c0_0] : memref<8x32xf32, #tpu.memory_space<vmem>>, vector<8x32xf32>
    %1 = arith.truncf %0 : vector<8x32xf32> to vector<8x32xbf16>
    %c0_1 = arith.constant 0 : index
    %c0_2 = arith.constant 0 : index
    %2 = vector.load %arg2[%c0_1, %c0_2] : memref<32x128xbf16, #tpu.memory_space<vmem>>, vector<32x128xbf16>
    %cst = arith.constant dense<0.000000e+00> : vector<8x128xf32>
    %3 = tpu.matmul %1, %2, %cst {dimension_numbers = #tpu.dot_dimension_numbers<[1], [0], [0], [1], [0, 0, 1, 1], [], []>} : vector<8x32xbf16>, vector<32x128xbf16>, vector<8x128xf32> -> vector<8x128xf32>
    %c0_3 = arith.constant 0 : index
    %c0_4 = arith.constant 0 : index
    %4 = vector.load %arg4[%c0_3, %c0_4] : memref<1x128xf32, #tpu.memory_space<vmem>>, vector<1x128xf32>
    %5 = vector.broadcast %4 : vector<1x128xf32> to vector<8x128xf32>
    %6 = arith.addf %3, %5 : vector<8x128xf32>
    %c0_5 = arith.constant 0 : index
    %c0_6 = arith.constant 0 : index
    %7 = vector.load %arg3[%c0_5, %c0_6] : memref<32x128xbf16, #tpu.memory_space<vmem>>, vector<32x128xbf16>
    %cst_7 = arith.constant dense<0.000000e+00> : vector<8x128xf32>
    %8 = tpu.matmul %1, %7, %cst_7 {dimension_numbers = #tpu.dot_dimension_numbers<[1], [0], [0], [1], [0, 0, 1, 1], [], []>} : vector<8x32xbf16>, vector<32x128xbf16>, vector<8x128xf32> -> vector<8x128xf32>
    %c0_8 = arith.constant 0 : index
    %c0_9 = arith.constant 0 : index
    %9 = vector.load %arg5[%c0_8, %c0_9] : memref<1x128xf32, #tpu.memory_space<vmem>>, vector<1x128xf32>
    %10 = vector.broadcast %9 : vector<1x128xf32> to vector<8x128xf32>
    %11 = arith.addf %8, %10 : vector<8x128xf32>
    %cst_10 = arith.constant 5.000000e-01 : f32
    %12 = vector.broadcast %cst_10 : f32 to vector<8x128xf32>
    %13 = arith.mulf %12, %11 : vector<8x128xf32>
    %cst_11 = arith.constant 0.707106769 : f32
    %14 = vector.broadcast %cst_11 : f32 to vector<8x128xf32>
    %15 = arith.mulf %11, %14 : vector<8x128xf32>
    %16 = math.erf %15 : vector<8x128xf32>
    %cst_12 = arith.constant 1.000000e+00 : f32
    %17 = vector.broadcast %cst_12 : f32 to vector<8x128xf32>
    %18 = arith.addf %17, %16 : vector<8x128xf32>
    %19 = arith.mulf %13, %18 : vector<8x128xf32>
    %20 = arith.mulf %6, %19 : vector<8x128xf32>
    %21 = arith.truncf %20 : vector<8x128xf32> to vector<8x128xbf16>
    %c0_13 = arith.constant 0 : index
    %c0_14 = arith.constant 0 : index
    %22 = vector.load %arg6[%c0_13, %c0_14] : memref<128x32xbf16, #tpu.memory_space<vmem>>, vector<128x32xbf16>
    %cst_15 = arith.constant dense<0.000000e+00> : vector<8x32xf32>
    %23 = tpu.matmul %21, %22, %cst_15 {dimension_numbers = #tpu.dot_dimension_numbers<[1], [0], [0], [1], [0, 0, 1, 1], [], []>} : vector<8x128xbf16>, vector<128x32xbf16>, vector<8x32xf32> -> vector<8x32xf32>
    %c0_16 = arith.constant 0 : index
    %c0_17 = arith.constant 0 : index
    %24 = vector.load %arg7[%c0_16, %c0_17] : memref<1x32xf32, #tpu.memory_space<vmem>>, vector<1x32xf32>
    %25 = vector.broadcast %24 : vector<1x32xf32> to vector<8x32xf32>
    %26 = arith.addf %23, %25 : vector<8x32xf32>
    %c0_18 = arith.constant 0 : index
    %c0_19 = arith.constant 0 : index
    %27 = vector.load %arg8[%c0_18, %c0_19] : memref<8x32xf32, #tpu.memory_space<vmem>>, vector<8x32xf32>
    tpu.vector_store %arg8[%c0_18, %c0_19], %26 {strides = array<i32>} : memref<8x32xf32, #tpu.memory_space<vmem>>, vector<8x32xf32>,
    return
  }
  func.func @transform_0(%arg0: i32) -> (i32, i32) {
    %c0_i32 = arith.constant 0 : i32
    %c0_i32_0 = arith.constant 0 : i32
    return %arg0, %c0_i32 : i32, i32
  }
  func.func @transform_1(%arg0: i32) -> (i32, i32) {
    %c0_i32 = arith.constant 0 : i32
    %c0_i32_0 = arith.constant 0 : i32
    %c0_i32_1 = arith.constant 0 : i32
    return %c0_i32, %c0_i32_0 : i32, i32
  }
  func.func @transform_2(%arg0: i32) -> (i32, i32) {
    %c0_i32 = arith.constant 0 : i32
    %c0_i32_0 = arith.constant 0 : i32
    %c0_i32_1 = arith.constant 0 : i32
    return %c0_i32, %c0_i32_0 : i32, i32
  }
  func.func @transform_3(%arg0: i32) -> (i32, i32) {
    %c0_i32 = arith.constant 0 : i32
    %c0_i32_0 = arith.constant 0 : i32
    %c0_i32_1 = arith.constant 0 : i32
    return %c0_i32, %c0_i32_0 : i32, i32
  }
  func.func @transform_4(%arg0: i32) -> (i32, i32) {
    %c0_i32 = arith.constant 0 : i32
    %c0_i32_0 = arith.constant 0 : i32
    %c0_i32_1 = arith.constant 0 : i32
    return %c0_i32, %c0_i32_0 : i32, i32
  }
  func.func @transform_5(%arg0: i32) -> (i32, i32) {
    %c0_i32 = arith.constant 0 : i32
    %c0_i32_0 = arith.constant 0 : i32
    %c0_i32_1 = arith.constant 0 : i32
    return %c0_i32, %c0_i32_0 : i32, i32
  }
  func.func @transform_6(%arg0: i32) -> (i32, i32) {
    %c0_i32 = arith.constant 0 : i32
    %c0_i32_0 = arith.constant 0 : i32
    %c0_i32_1 = arith.constant 0 : i32
    return %c0_i32, %c0_i32_0 : i32, i32
  }
  func.func @transform_7(%arg0: i32) -> (i32, i32) {
    %c0_i32 = arith.constant 0 : i32
    %c0_i32_0 = arith.constant 0 : i32
    return %arg0, %c0_i32 : i32, i32
  }
}

module attributes {stable_mosaic.version = 11 : i64} {
  func.func @_ff_kernel(%arg0: i32, %arg1: memref<8x32xf32, #tpu.memory_space<vmem>>, %arg2: memref<32x128xbf16, #tpu.memory_space<vmem>>, %arg3: memref<32x128xbf16, #tpu.memory_space<vmem>>, %arg4: memref<1x128xf32, #tpu.memory_space<vmem>>, %arg5: memref<1x128xf32, #tpu.memory_space<vmem>>, %arg6: memref<128x32xbf16, #tpu.memory_space<vmem>>, %arg7: memref<1x32xf32, #tpu.memory_space<vmem>>, %arg8: memref<8x32xf32, #tpu.memory_space<vmem>>) attributes {dimension_semantics = [#tpu.dimension_semantics<parallel>], iteration_bounds = array<i64: 2>, scalar_prefetch = 0 : i64, scratch_operands = 0 : i64, tpu.core_type = #tpu.core_type<tc>, window_params = [{transform_indices = @transform_0, window_bounds = array<i64: 8, 32>}, {pipeline_mode = #tpu.pipeline_mode<synchronous>, transform_indices = @transform_1, window_bounds = array<i64: 32, 128>}, {pipeline_mode = #tpu.pipeline_mode<synchronous>, transform_indices = @transform_2, window_bounds = array<i64: 32, 128>}, {pipeline_mode = #tpu.pipeline_mode<synchronous>, transform_indices = @transform_3, window_bounds = array<i64: 1, 128>}, {pipeline_mode = #tpu.pipeline_mode<synchronous>, transform_indices = @transform_4, window_bounds = array<i64: 1, 128>}, {pipeline_mode = #tpu.pipeline_mode<synchronous>, transform_indices = @transform_5, window_bounds = array<i64: 128, 32>}, {pipeline_mode = #tpu.pipeline_mode<synchronous>, transform_indices = @transform_6, window_bounds = array<i64: 1, 32>}, {transform_indices = @transform_7, window_bounds = array<i64: 8, 32>}]} {
    %c0 = arith.constant 0 : index
    %c0_0 = arith.constant 0 : index
    %0 = vector.load %arg1[%c0, %c0_0] : memref<8x32xf32, #tpu.memory_space<vmem>>, vector<8x32xf32>
    %1 = arith.truncf %0 : vector<8x32xf32> to vector<8x32xbf16>
    %c0_1 = arith.constant 0 : index
    %c0_2 = arith.constant 0 : index
    %2 = vector.load %arg2[%c0_1, %c0_2] : memref<32x128xbf16, #tpu.memory_space<vmem>>, vector<32x128xbf16>
    %cst = arith.constant dense<0.000000e+00> : vector<8x128xf32>
    %3 = tpu.matmul %1, %2, %cst {dimension_numbers = #tpu.dot_dimension_numbers<[1], [0], [0], [1], [0, 0, 1, 1], [], []>} : vector<8x32xbf16>, vector<32x128xbf16>, vector<8x128xf32> -> vector<8x128xf32>
    %c0_3 = arith.constant 0 : index
    %c0_4 = arith.constant 0 : index
    %4 = vector.load %arg4[%c0_3, %c0_4] : memref<1x128xf32, #tpu.memory_space<vmem>>, vector<1x128xf32>
    %5 = vector.broadcast %4 : vector<1x128xf32> to vector<8x128xf32>
    %6 = arith.addf %3, %5 : vector<8x128xf32>
    %c0_5 = arith.constant 0 : index
    %c0_6 = arith.constant 0 : index
    %7 = vector.load %arg3[%c0_5, %c0_6] : memref<32x128xbf16, #tpu.memory_space<vmem>>, vector<32x128xbf16>
    %cst_7 = arith.constant dense<0.000000e+00> : vector<8x128xf32>
    %8 = tpu.matmul %1, %7, %cst_7 {dimension_numbers = #tpu.dot_dimension_numbers<[1], [0], [0], [1], [0, 0, 1, 1], [], []>} : vector<8x32xbf16>, vector<32x128xbf16>, vector<8x128xf32> -> vector<8x128xf32>
    %c0_8 = arith.constant 0 : index
    %c0_9 = arith.constant 0 : index
    %9 = vector.load %arg5[%c0_8, %c0_9] : memref<1x128xf32, #tpu.memory_space<vmem>>, vector<1x128xf32>
    %10 = vector.broadcast %9 : vector<1x128xf32> to vector<8x128xf32>
    %11 = arith.addf %8, %10 : vector<8x128xf32>
    %cst_10 = arith.constant 5.000000e-01 : f32
    %12 = vector.broadcast %cst_10 : f32 to vector<8x128xf32>
    %13 = arith.mulf %12, %11 : vector<8x128xf32>
    %cst_11 = arith.constant 0.707106769 : f32
    %14 = vector.broadcast %cst_11 : f32 to vector<8x128xf32>
    %15 = arith.mulf %11, %14 : vector<8x128xf32>
    %16 = math.erf %15 : vector<8x128xf32>
    %cst_12 = arith.constant 1.000000e+00 : f32
    %17 = vector.broadcast %cst_12 : f32 to vector<8x128xf32>
    %18 = arith.addf %17, %16 : vector<8x128xf32>
    %19 = arith.mulf %13, %18 : vector<8x128xf32>
    %20 = arith.mulf %6, %19 : vector<8x128xf32>
    %21 = arith.truncf %20 : vector<8x128xf32> to vector<8x128xbf16>
    %c0_13 = arith.constant 0 : index
    %c0_14 = arith.constant 0 : index
    %22 = vector.load %arg6[%c0_13, %c0_14] : memref<128x32xbf16, #tpu.memory_space<vmem>>, vector<128x32xbf16>
    %cst_15 = arith.constant dense<0.000000e+00> : vector<8x32xf32>
    %23 = tpu.matmul %21, %22, %cst_15 {dimension_numbers = #tpu.dot_dimension_numbers<[1], [0], [0], [1], [0, 0, 1, 1], [], []>} : vector<8x128xbf16>, vector<128x32xbf16>, vector<8x32xf32> -> vector<8x32xf32>
    %c0_16 = arith.constant 0 : index
    %c0_17 = arith.constant 0 : index
    %24 = vector.load %arg7[%c0_16, %c0_17] : memref<1x32xf32, #tpu.memory_space<vmem>>, vector<1x32xf32>
    %25 = vector.broadcast %24 : vector<1x32xf32> to vector<8x32xf32>
    %26 = arith.addf %23, %25 : vector<8x32xf32>
    %c0_18 = arith.constant 0 : index
    %c0_19 = arith.constant 0 : index
    %27 = vector.load %arg8[%c0_18, %c0_19] : memref<8x32xf32, #tpu.memory_space<vmem>>, vector<8x32xf32>
    tpu.vector_store %arg8[%c0_18, %c0_19], %26 {strides = array<i32>} : memref<8x32xf32, #tpu.memory_space<vmem>>, vector<8x32xf32>,
    return
  }
  func.func @transform_0(%arg0: i32) -> (i32, i32) {
    %c0_i32 = arith.constant 0 : i32
    %c0_i32_0 = arith.constant 0 : i32
    return %arg0, %c0_i32 : i32, i32
  }
  func.func @transform_1(%arg0: i32) -> (i32, i32) {
    %c0_i32 = arith.constant 0 : i32
    %c0_i32_0 = arith.constant 0 : i32
    %c0_i32_1 = arith.constant 0 : i32
    return %c0_i32, %c0_i32_0 : i32, i32
  }
  func.func @transform_2(%arg0: i32) -> (i32, i32) {
    %c0_i32 = arith.constant 0 : i32
    %c0_i32_0 = arith.constant 0 : i32
    %c0_i32_1 = arith.constant 0 : i32
    return %c0_i32, %c0_i32_0 : i32, i32
  }
  func.func @transform_3(%arg0: i32) -> (i32, i32) {
    %c0_i32 = arith.constant 0 : i32
    %c0_i32_0 = arith.constant 0 : i32
    %c0_i32_1 = arith.constant 0 : i32
    return %c0_i32, %c0_i32_0 : i32, i32
  }
  func.func @transform_4(%arg0: i32) -> (i32, i32) {
    %c0_i32 = arith.constant 0 : i32
    %c0_i32_0 = arith.constant 0 : i32
    %c0_i32_1 = arith.constant 0 : i32
    return %c0_i32, %c0_i32_0 : i32, i32
  }
  func.func @transform_5(%arg0: i32) -> (i32, i32) {
    %c0_i32 = arith.constant 0 : i32
    %c0_i32_0 = arith.constant 0 : i32
    %c0_i32_1 = arith.constant 0 : i32
    return %c0_i32, %c0_i32_0 : i32, i32
  }
  func.func @transform_6(%arg0: i32) -> (i32, i32) {
    %c0_i32 = arith.constant 0 : i32
    %c0_i32_0 = arith.constant 0 : i32
    %c0_i32_1 = arith.constant 0 : i32
    return %c0_i32, %c0_i32_0 : i32, i32
  }
  func.func @transform_7(%arg0: i32) -> (i32, i32) {
    %c0_i32 = arith.constant 0 : i32
    %c0_i32_0 = arith.constant 0 : i32
    return %arg0, %c0_i32 : i32, i32
  }
}

</mosaic_0001>

<llo_original>
// kernel: tpu_custom_call.1
$region0: #{tpu_custom_call.1}
  #allocation0 [shape = 'u32[]', space=smem, size = 0x4, offset = 0x4, fixed_abs, tag = 'smem constant byte address 0x4 - core index']
  #allocation1 [shape = 'u32[144,128]{1,0:T(1,128)}', space=vmem, size = 0x12000, scoped, tag = 'internal scratch']
  %s0 = inlined_call_operand.vmem [shape: f32[16,32], index: 0, kind: input, shape index: {}]
  %s1 = inlined_call_operand.vmem [shape: bf16[32,128], index: 1, kind: input, shape index: {}]
  %s2 = inlined_call_operand.vmem [shape: bf16[32,128], index: 2, kind: input, shape index: {}]
  %s3 = inlined_call_operand.vmem [shape: f32[1,128], index: 3, kind: input, shape index: {}]
  %s4 = inlined_call_operand.vmem [shape: f32[1,128], index: 4, kind: input, shape index: {}]
  %s5 = inlined_call_operand.vmem [shape: bf16[128,32], index: 5, kind: input, shape index: {}]
  %s6 = inlined_call_operand.vmem [shape: f32[1,32], index: 6, kind: input, shape index: {}]
  %s7 = inlined_call_operand.hbm [shape: f32[16,32], index: 7, kind: output, shape index: {}]
  %s8 = sld [smem:[#allocation0]]
  $region61: #{tpu_custom_call.1} parent=0
    _
  %s10 = ssub.s32 1, %s8
  %s11 = scalar_select 0, %s10, %s8
  $region1: #{tpu_custom_call.1} parent=0
    #allocation2 [shape = 'u8[8192]{0}', space=vmem, size = 0x2000, scoped, tag = 'output window, operand 0']
    #allocation3 [shape = 's32[2]{0}', space=sflag, size = 0x8, scoped, tag = 'scoped memory for tpu_custom_call.1']
    %12 = vsyncpa [#allocation3], 0
    %s13 = scalar_lea.sflag [#allocation3], 1
    %14 = vsyncpa %s13, 0
    loop: start=0, step=1, limit=4
    $region2: #{tpu_custom_call.1} parent=1 // loop_pre_header
      _
    $region3: #{tpu_custom_call.1} parent=1 // loop_header
      %s16 = sphi 0, %s20
      %p17 = scmp.ge.s32.totalorder %s16, 4
      %s26 = sphi 0, %s28
      %s29 = sphi 0, %s26
      %s30 = sphi 0, %s29
      %s46 = sphi 0, %s30
      %s50 = sphi 0, %s50
      %s52 = sphi 0, %s50
      %s53 = sphi 0, %s52
      %s67 = sphi 0, %s53
      %s71 = sphi 0, %s71
      %s73 = sphi 0, %s71
      %s74 = sphi 0, %s73
      %s88 = sphi 0, %s74
      %s92 = sphi 0, %s92
      %s94 = sphi 0, %s92
      %s95 = sphi 0, %s94
      %s109 = sphi 0, %s95
      %s113 = sphi 0, %s113
      %s115 = sphi 0, %s113
      %s116 = sphi 0, %s115
      %s130 = sphi 0, %s116
      %s134 = sphi 0, %s134
      %s136 = sphi 0, %s134
      %s137 = sphi 0, %s136
      %s151 = sphi 0, %s137
      %s155 = sphi 0, %s155
      %s157 = sphi 0, %s155
      %s158 = sphi 0, %s157
      %s172 = sphi 0, %s158
      %s178 = sphi 0, %s180
      %s181 = sphi 0, %s178
      %s182 = sphi 0, %s181
      %s198 = sphi 0, %s182
    $region4: #{tpu_custom_call.1} parent=1 // loop_header_branch
      %19 = sbr.rel (%p17) target = $region8
    $region5: #{tpu_custom_call.1} parent=1 // loop_body
      %s21 = ssub.s32 %s16, 1
      %s22 = ssub.s32 %s16, 2
      %s23 = sadd.s32 %s16, 1
      %s24 = ssub.s32 %s16, %s23
      %p25 = scmp.eq.s32.totalorder %s24, 0
      %s27 = sadd.s32 %s26, 1
      %s28 = scalar_select %p25, %s26, %s27
      %p31 = pneg %p25
      %p32 = scmp.eq.s32.totalorder %s16, 1
      %p33 = por %p31, %p32
      %p34 = scmp.ne.s32.totalorder %s26, %s29
      %p35 = scmp.eq.s32.totalorder %s16, 0
      %p36 = por %p34, %p35
      %p37 = scmp.ne.s32.totalorder %s26, %s29
      %p38 = scmp.eq.s32.totalorder %s21, 1
      %p39 = por %p37, %p38
      %p40 = scmp.ne.s32.totalorder %s29, %s30
      %p41 = scmp.eq.s32.totalorder %s21, 0
      %p42 = por %p40, %p41
      %p43 = scmp.ne.s32.totalorder %s29, %s30
      %p44 = scmp.eq.s32.totalorder %s22, 1
      %p45 = por %p43, %p44
      %p47 = scmp.ne.s32.totalorder %s30, %s46
      %p48 = scmp.eq.s32.totalorder %s22, 0
      %p49 = por %p47, %p48
      %s51 = sadd.s32 %s50, 1
      %p54 = scmp.eq.s32.totalorder %s16, 1
      %p55 = scmp.ne.s32.totalorder %s50, %s52
      %p56 = scmp.eq.s32.totalorder %s16, 0
      %p57 = por %p55, %p56
      %p58 = scmp.ne.s32.totalorder %s50, %s52
      %p59 = scmp.eq.s32.totalorder %s21, 1
      %p60 = por %p58, %p59
      %p61 = scmp.ne.s32.totalorder %s52, %s53
      %p62 = scmp.eq.s32.totalorder %s21, 0
      %p63 = por %p61, %p62
      %p64 = scmp.ne.s32.totalorder %s52, %s53
      %p65 = scmp.eq.s32.totalorder %s22, 1
      %p66 = por %p64, %p65
      %p68 = scmp.ne.s32.totalorder %s53, %s67
      %p69 = scmp.eq.s32.totalorder %s22, 0
      %p70 = por %p68, %p69
      %s72 = sadd.s32 %s71, 1
      %p75 = scmp.eq.s32.totalorder %s16, 1
      %p76 = scmp.ne.s32.totalorder %s71, %s73
      %p77 = scmp.eq.s32.totalorder %s16, 0
      %p78 = por %p76, %p77
      %p79 = scmp.ne.s32.totalorder %s71, %s73
      %p80 = scmp.eq.s32.totalorder %s21, 1
      %p81 = por %p79, %p80
      %p82 = scmp.ne.s32.totalorder %s73, %s74
      %p83 = scmp.eq.s32.totalorder %s21, 0
      %p84 = por %p82, %p83
      %p85 = scmp.ne.s32.totalorder %s73, %s74
      %p86 = scmp.eq.s32.totalorder %s22, 1
      %p87 = por %p85, %p86
      %p89 = scmp.ne.s32.totalorder %s74, %s88
      %p90 = scmp.eq.s32.totalorder %s22, 0
      %p91 = por %p89, %p90
      %s93 = sadd.s32 %s92, 1
      %p96 = scmp.eq.s32.totalorder %s16, 1
      %p97 = scmp.ne.s32.totalorder %s92, %s94
      %p98 = scmp.eq.s32.totalorder %s16, 0
      %p99 = por %p97, %p98
      %p100 = scmp.ne.s32.totalorder %s92, %s94
      %p101 = scmp.eq.s32.totalorder %s21, 1
      %p102 = por %p100, %p101
      %p103 = scmp.ne.s32.totalorder %s94, %s95
      %p104 = scmp.eq.s32.totalorder %s21, 0
      %p105 = por %p103, %p104
      %p106 = scmp.ne.s32.totalorder %s94, %s95
      %p107 = scmp.eq.s32.totalorder %s22, 1
      %p108 = por %p106, %p107
      %p110 = scmp.ne.s32.totalorder %s95, %s109
      %p111 = scmp.eq.s32.totalorder %s22, 0
      %p112 = por %p110, %p111
      %s114 = sadd.s32 %s113, 1
      %p117 = scmp.eq.s32.totalorder %s16, 1
      %p118 = scmp.ne.s32.totalorder %s113, %s115
      %p119 = scmp.eq.s32.totalorder %s16, 0
      %p120 = por %p118, %p119
      %p121 = scmp.ne.s32.totalorder %s113, %s115
      %p122 = scmp.eq.s32.totalorder %s21, 1
      %p123 = por %p121, %p122
      %p124 = scmp.ne.s32.totalorder %s115, %s116
      %p125 = scmp.eq.s32.totalorder %s21, 0
      %p126 = por %p124, %p125
      %p127 = scmp.ne.s32.totalorder %s115, %s116
      %p128 = scmp.eq.s32.totalorder %s22, 1
      %p129 = por %p127, %p128
      %p131 = scmp.ne.s32.totalorder %s116, %s130
      %p132 = scmp.eq.s32.totalorder %s22, 0
      %p133 = por %p131, %p132
      %s135 = sadd.s32 %s134, 1
      %p138 = scmp.eq.s32.totalorder %s16, 1
      %p139 = scmp.ne.s32.totalorder %s134, %s136
      %p140 = scmp.eq.s32.totalorder %s16, 0
      %p141 = por %p139, %p140
      %p142 = scmp.ne.s32.totalorder %s134, %s136
      %p143 = scmp.eq.s32.totalorder %s21, 1
      %p144 = por %p142, %p143
      %p145 = scmp.ne.s32.totalorder %s136, %s137
      %p146 = scmp.eq.s32.totalorder %s21, 0
      %p147 = por %p145, %p146
      %p148 = scmp.ne.s32.totalorder %s136, %s137
      %p149 = scmp.eq.s32.totalorder %s22, 1
      %p150 = por %p148, %p149
      %p152 = scmp.ne.s32.totalorder %s137, %s151
      %p153 = scmp.eq.s32.totalorder %s22, 0
      %p154 = por %p152, %p153
      %s156 = sadd.s32 %s155, 1
      %p159 = scmp.eq.s32.totalorder %s16, 1
      %p160 = scmp.ne.s32.totalorder %s155, %s157
      %p161 = scmp.eq.s32.totalorder %s16, 0
      %p162 = por %p160, %p161
      %p163 = scmp.ne.s32.totalorder %s155, %s157
      %p164 = scmp.eq.s32.totalorder %s21, 1
      %p165 = por %p163, %p164
      %p166 = scmp.ne.s32.totalorder %s157, %s158
      %p167 = scmp.eq.s32.totalorder %s21, 0
      %p168 = por %p166, %p167
      %p169 = scmp.ne.s32.totalorder %s157, %s158
      %p170 = scmp.eq.s32.totalorder %s22, 1
      %p171 = por %p169, %p170
      %p173 = scmp.ne.s32.totalorder %s158, %s172
      %p174 = scmp.eq.s32.totalorder %s22, 0
      %p175 = por %p173, %p174
      %s176 = ssub.s32 %s16, %s23
      %p177 = scmp.eq.s32.totalorder %s176, 0
      %s179 = sadd.s32 %s178, 1
      %s180 = scalar_select %p177, %s178, %s179
      %p183 = pneg %p177
      %p184 = scmp.eq.s32.totalorder %s16, 1
      %p185 = por %p183, %p184
      %p186 = scmp.ne.s32.totalorder %s178, %s181
      %p187 = scmp.eq.s32.totalorder %s16, 0
      %p188 = por %p186, %p187
      %p189 = scmp.ne.s32.totalorder %s178, %s181
      %p190 = scmp.eq.s32.totalorder %s21, 1
      %p191 = por %p189, %p190
      %p192 = scmp.ne.s32.totalorder %s181, %s182
      %p193 = scmp.eq.s32.totalorder %s21, 0
      %p194 = por %p192, %p193
      %p195 = scmp.ne.s32.totalorder %s181, %s182
      %p196 = scmp.eq.s32.totalorder %s22, 1
      %p197 = por %p195, %p196
      %p199 = scmp.ne.s32.totalorder %s182, %s198
      %p200 = scmp.eq.s32.totalorder %s22, 0
      %p201 = por %p199, %p200
      %p202 = scmp.le.s32.totalorder 1, %s16
      %p203 = scmp.lt.s32.totalorder %s16, 3
      %p204 = pnand %p202, %p203
      %p205 = pneg %p204
      // Predicated region
      $region9: #{tpu_custom_call.1} parent=5 // pred_check
        _
      $region10: #{tpu_custom_call.1} parent=5 // pred_check_branch
        %207 = sbr.rel (%p204) target = $region12
      $region11: #{tpu_custom_call.1} parent=5 // pred_region
        %s208 = ssub.s32 %s16, 1
        // Predicated region
        $region13: #{tpu_custom_call.1} parent=11 // pred_check
          %p209 = pneg %p63
        $region14: #{tpu_custom_call.1} parent=11 // pred_check_branch
          %211 = sbr.rel (%p209) target = $region16
        $region15: #{tpu_custom_call.1} parent=11 // pred_region
          _
        $region16: #{tpu_custom_call.1} parent=11 // pred_fallthru
          _
        // Predicated region
        $region17: #{tpu_custom_call.1} parent=11 // pred_check
          %p212 = pneg %p84
        $region18: #{tpu_custom_call.1} parent=11 // pred_check_branch
          %214 = sbr.rel (%p212) target = $region20
        $region19: #{tpu_custom_call.1} parent=11 // pred_region
          _
        $region20: #{tpu_custom_call.1} parent=11 // pred_fallthru
          _
        // Predicated region
        $region21: #{tpu_custom_call.1} parent=11 // pred_check
          %p215 = pneg %p105
        $region22: #{tpu_custom_call.1} parent=11 // pred_check_branch
          %217 = sbr.rel (%p215) target = $region24
        $region23: #{tpu_custom_call.1} parent=11 // pred_region
          _
        $region24: #{tpu_custom_call.1} parent=11 // pred_fallthru
          _
        // Predicated region
        $region25: #{tpu_custom_call.1} parent=11 // pred_check
          %p218 = pneg %p126
        $region26: #{tpu_custom_call.1} parent=11 // pred_check_branch
          %220 = sbr.rel (%p218) target = $region28
        $region27: #{tpu_custom_call.1} parent=11 // pred_region
          _
        $region28: #{tpu_custom_call.1} parent=11 // pred_fallthru
          _
        // Predicated region
        $region29: #{tpu_custom_call.1} parent=11 // pred_check
          %p221 = pneg %p147
        $region30: #{tpu_custom_call.1} parent=11 // pred_check_branch
          %223 = sbr.rel (%p221) target = $region32
        $region31: #{tpu_custom_call.1} parent=11 // pred_region
          _
        $region32: #{tpu_custom_call.1} parent=11 // pred_fallthru
          _
        // Predicated region
        $region33: #{tpu_custom_call.1} parent=11 // pred_check
          %p224 = pneg %p168
        $region34: #{tpu_custom_call.1} parent=11 // pred_check_branch
          %226 = sbr.rel (%p224) target = $region36
        $region35: #{tpu_custom_call.1} parent=11 // pred_region
          _
        $region36: #{tpu_custom_call.1} parent=11 // pred_fallthru
          _
      $region12: #{tpu_custom_call.1} parent=5 // pred_fallthru
        _
      %p227 = scmp.lt.s32.totalorder %s16, 2
      // Predicated region
      $region37: #{tpu_custom_call.1} parent=5 // pred_check
        %p228 = pneg %p227
      $region38: #{tpu_custom_call.1} parent=5 // pred_check_branch
        %230 = sbr.rel (%p228) target = $region40
      $region39: #{tpu_custom_call.1} parent=5 // pred_region
        // Predicated region
        $region41: #{tpu_custom_call.1} parent=39 // pred_check
          %p231 = pneg %p36
        $region42: #{tpu_custom_call.1} parent=39 // pred_check_branch
          %233 = sbr.rel (%p231) target = $region44
        $region43: #{tpu_custom_call.1} parent=39 // pred_region
          %p234 = scmp.lt.s32.totalorder %s16, 1
          %s235 = scalar_select %p234, %s16, 1
          %s236 = smul.addr %s235, 8
          %s237 = scalar_lea.vmem %s0, %s236
        $region44: #{tpu_custom_call.1} parent=39 // pred_fallthru
          _
      $region40: #{tpu_custom_call.1} parent=5 // pred_fallthru
        _
      %p238 = scmp.le.s32.totalorder 1, %s16
      %p239 = scmp.lt.s32.totalorder %s16, 3
      %p240 = pnand %p238, %p239
      %p241 = pneg %p240
      // Predicated region
      $region45: #{tpu_custom_call.1} parent=5 // pred_check
        _
      $region46: #{tpu_custom_call.1} parent=5 // pred_check_branch
        %243 = sbr.rel (%p240) target = $region48
      $region47: #{tpu_custom_call.1} parent=5 // pred_region
        %s244 = ssub.s32 %s16, 1
        %p245 = scmp.lt.s32.totalorder %s21, 1
        %s246 = scalar_select %p245, %s21, 1
        %s247 = smul.addr %s246, 8
        %s248 = scalar_lea.vmem %s0, %s247
        %p249 = pneg %p42
        %p250 = pneg %p39
        %p251 = pneg %p63
        %p252 = pneg %p60
        %p253 = pneg %p84
        %p254 = pneg %p81
        %p255 = pneg %p105
        %p256 = pneg %p102
        %p257 = pneg %p126
        %p258 = pneg %p123
        %p259 = pneg %p147
        %p260 = pneg %p144
        %p261 = pneg %p168
        %p262 = pneg %p165
        %p263 = pneg %p194
        %p264 = pneg %p191
        %s265 = sand.u32 %s181, 1
        %s266 = scalar_lea.sflag [#allocation3], %s265
        %s267 = sand.u32 %s181, 1
        %s268 = smul.addr %s267, 8
        %s269 = scalar_lea.vmem [#allocation2], %s268
        %p270 = scmp.lt.s32.totalorder %s21, 1
        %s271 = scalar_select %p270, %s21, 1
        %s272 = smul.addr %s271, 8
        %s273 = scalar_lea.vmem %s0, %s272
        %v275 = vld [vmem:[%s273] sm:$0xff]
        %v276 = vpack.c.bf16 %v275, %v275
        %v277 = vld [vmem:[%s1] sm:$0xf]
        %v278 = vld [vmem:[%s1 + $0x4] sm:$0xf]
        %v279 = vld [vmem:[%s1 + $0x8] sm:$0xf]
        %v280 = vld [vmem:[%s1 + $0xc] sm:$0xf]
        %v281 = vld [vmem:[%s3] sm:$0x1]
        %v283 = vlaneseq
        %v284 = vshrl.u32 %v283, 7
        %v285 = vsub.s32 0, %v284
        %v286 = vrot.slane %v281, %v285
        %v292 = vunpack.c.l.b16 %v277
        %v293 = vunpack.c.l.b16 %v278
        %v294 = vunpack.c.l.b16 %v279
        %v295 = vunpack.c.l.b16 %v280
        %v296 = vpack.c.b16 %v293, %v292
        %v297 = vpack.c.b16 %v295, %v294
        %vm300 = vcmask 261120
        %v302 = vsel %vm300, %v276, 0
        %304 = vmatprep.subr.bf16.mxu0 0
        %305 = vmatpush1.bf16.msra.mxu0 0
        %306 = vmatprep.subr.bf16.mxu0 0
        %307 = vmatpush1.bf16.msra.mxu0 0
        %308 = vmatprep.subr.bf16.mxu0 0
        %309 = vmatpush1.bf16.msra.mxu0 0
        %310 = vmatprep.subr.bf16.mxu0 0
        %311 = vmatpush1.bf16.msra.mxu0 0
        %312 = vmatprep.subr.bf16.mxu0 0
        %313 = vmatpush1.bf16.msra.mxu0 0
        %314 = vmatprep.subr.bf16.mxu0 0
        %315 = vmatpush1.bf16.msra.mxu0 0
        %316 = vmatprep.subr.bf16.mxu0 0
        %317 = vmatpush1.bf16.msra.mxu0 %v297
        %318 = vmatprep.subr.bf16.mxu0 0
        %319 = vmatpush1.bf16.msra.mxu0 %v296
        %320 = vmatprep.subr.bf16.mxu0 0
        %321 = vmatpush2.bf16.msra.mxu0 0
        %322 = vmatprep.subr.bf16.mxu0 0
        %323 = vmatpush2.bf16.msra.mxu0 0
        %324 = vmatprep.subr.bf16.mxu0 0
        %325 = vmatpush2.bf16.msra.mxu0 0
        %326 = vmatprep.subr.bf16.mxu0 0
        %327 = vmatpush2.bf16.msra.mxu0 0
        %328 = vmatprep.subr.bf16.mxu0 0
        %329 = vmatpush2.bf16.msra.mxu0 0
        %330 = vmatprep.subr.bf16.mxu0 0
        %331 = vmatpush2.bf16.msra.mxu0 0
        %332 = vmatprep.subr.bf16.mxu0 0
        %333 = vmatpush2.bf16.msra.mxu0 0
        %334 = vmatprep.subr.bf16.mxu0 0
        %335 = vmatpush2.bf16.msra.mxu0 0
        %336 = vmatprep.mubr.bf16.mxu0 0
        %337 = vmatmul.mubr.bf16.gmra.mxu0 %v302
        %v338 = vpop.f32.mrf.mxu0
        %v339 = vadd.f32 %v286, %v338
        %v340 = vpop.f32.mrf.mxu0
        %v341 = vpop.f32.mrf.mxu0
        %v342 = vpop.f32.mrf.mxu0
        %343 = vdwg.mxu0
        %v344 = vld [vmem:[%s2] sm:$0xf]
        %v345 = vld [vmem:[%s2 + $0x4] sm:$0xf]
        %v346 = vld [vmem:[%s2 + $0x8] sm:$0xf]
        %v347 = vld [vmem:[%s2 + $0xc] sm:$0xf]
        %v348 = vld [vmem:[%s4] sm:$0x1]
        %v350 = vlaneseq
        %v351 = vshrl.u32 %v350, 7
        %v352 = vsub.s32 0, %v351
        %v353 = vrot.slane %v348, %v352
        %v359 = vunpack.c.l.b16 %v344
        %v360 = vunpack.c.l.b16 %v345
        %v361 = vunpack.c.l.b16 %v346
        %v362 = vunpack.c.l.b16 %v347
        %v363 = vpack.c.b16 %v360, %v359
        %v364 = vpack.c.b16 %v362, %v361
        %367 = vmatprep.subr.bf16.mxu0 0
        %368 = vmatpush1.bf16.msra.mxu0 0
        %369 = vmatprep.subr.bf16.mxu0 0
        %370 = vmatpush1.bf16.msra.mxu0 0
        %371 = vmatprep.subr.bf16.mxu0 0
        %372 = vmatpush1.bf16.msra.mxu0 0
        %373 = vmatprep.subr.bf16.mxu0 0
        %374 = vmatpush1.bf16.msra.mxu0 0
        %375 = vmatprep.subr.bf16.mxu0 0
        %376 = vmatpush1.bf16.msra.mxu0 0
        %377 = vmatprep.subr.bf16.mxu0 0
        %378 = vmatpush1.bf16.msra.mxu0 0
        %379 = vmatprep.subr.bf16.mxu0 0
        %380 = vmatpush1.bf16.msra.mxu0 %v364
        %381 = vmatprep.subr.bf16.mxu0 0
        %382 = vmatpush1.bf16.msra.mxu0 %v363
        %383 = vmatprep.subr.bf16.mxu0 0
        %384 = vmatpush2.bf16.msra.mxu0 0
        %385 = vmatprep.subr.bf16.mxu0 0
        %386 = vmatpush2.bf16.msra.mxu0 0
        %387 = vmatprep.subr.bf16.mxu0 0
        %388 = vmatpush2.bf16.msra.mxu0 0
        %389 = vmatprep.subr.bf16.mxu0 0
        %390 = vmatpush2.bf16.msra.mxu0 0
        %391 = vmatprep.subr.bf16.mxu0 0
        %392 = vmatpush2.bf16.msra.mxu0 0
        %393 = vmatprep.subr.bf16.mxu0 0
        %394 = vmatpush2.bf16.msra.mxu0 0
        %395 = vmatprep.subr.bf16.mxu0 0
        %396 = vmatpush2.bf16.msra.mxu0 0
        %397 = vmatprep.subr.bf16.mxu0 0
        %398 = vmatpush2.bf16.msra.mxu0 0
        %399 = vmatprep.mubr.bf16.mxu0 0
        %400 = vmatmul.mubr.bf16.gmra.mxu0 %v302
        %v401 = vpop.f32.mrf.mxu0
        %v402 = vadd.f32 %v353, %v401
        %v403 = vpop.f32.mrf.mxu0
        %v404 = vpop.f32.mrf.mxu0
        %v405 = vpop.f32.mrf.mxu0
        %406 = vdwg.mxu0
        %v407 = vmul.f32 %v402, 0.5
        %v408 = vmul.f32 %v402, 0.70710677
        %v409 = verf.f32.pop %v408
        %v410 = vadd.f32 %v409, 1.0
        %v411 = vmul.f32 %v407, %v410
        %v412 = vmul.f32 %v339, %v411
        %v413 = vpack.c.bf16 %v412, %v412
        %v414 = vld [vmem:[%s5] sm:$0xf]
        %v415 = vld [vmem:[%s5 + $0x4] sm:$0xf]
        %v416 = vld [vmem:[%s5 + $0x8] sm:$0xf]
        %v417 = vld [vmem:[%s5 + $0xc] sm:$0xf]
        %v418 = vld [vmem:[%s5 + $0x10] sm:$0xf]
        %v419 = vld [vmem:[%s5 + $0x14] sm:$0xf]
        %v420 = vld [vmem:[%s5 + $0x18] sm:$0xf]
        %v421 = vld [vmem:[%s5 + $0x1c] sm:$0xf]
        %v422 = vld [vmem:[%s5 + $0x20] sm:$0xf]
        %v423 = vld [vmem:[%s5 + $0x24] sm:$0xf]
        %v424 = vld [vmem:[%s5 + $0x28] sm:$0xf]
        %v425 = vld [vmem:[%s5 + $0x2c] sm:$0xf]
        %v426 = vld [vmem:[%s5 + $0x30] sm:$0xf]
        %v427 = vld [vmem:[%s5 + $0x34] sm:$0xf]
        %v428 = vld [vmem:[%s5 + $0x38] sm:$0xf]
        %v429 = vld [vmem:[%s5 + $0x3c] sm:$0xf]
        %v430 = vld [vmem:[%s6] sm:$0x1]
        %v432 = vlaneseq
        %v433 = vshrl.u32 %v432, 7
        %v434 = vsub.s32 0, %v433
        %v435 = vrot.slane %v430, %v434
        %v453 = vunpack.c.l.b16 %v414
        %v454 = vunpack.c.l.b16 %v415
        %v455 = vunpack.c.l.b16 %v416
        %v456 = vunpack.c.l.b16 %v417
        %v457 = vunpack.c.l.b16 %v418
        %v458 = vunpack.c.l.b16 %v419
        %v459 = vunpack.c.l.b16 %v420
        %v460 = vunpack.c.l.b16 %v421
        %v461 = vunpack.c.l.b16 %v422
        %v462 = vunpack.c.l.b16 %v423
        %v463 = vunpack.c.l.b16 %v424
        %v464 = vunpack.c.l.b16 %v425
        %v465 = vunpack.c.l.b16 %v426
        %v466 = vunpack.c.l.b16 %v427
        %v467 = vunpack.c.l.b16 %v428
        %v468 = vunpack.c.l.b16 %v429
        %v469 = vpack.c.b16 %v454, %v453
        %v470 = vpack.c.b16 %v456, %v455
        %v471 = vpack.c.b16 %v458, %v457
        %v472 = vpack.c.b16 %v460, %v459
        %v473 = vpack.c.b16 %v462, %v461
        %v474 = vpack.c.b16 %v464, %v463
        %v475 = vpack.c.b16 %v466, %v465
        %v476 = vpack.c.b16 %v468, %v467
        %485 = vmatprep.subr.bf16.mxu0 0
        %486 = vmatpush1.bf16.msra.mxu0 %v476
        %487 = vmatprep.subr.bf16.mxu0 0
        %488 = vmatpush1.bf16.msra.mxu0 %v475
        %489 = vmatprep.subr.bf16.mxu0 0
        %490 = vmatpush1.bf16.msra.mxu0 %v474
        %491 = vmatprep.subr.bf16.mxu0 0
        %492 = vmatpush1.bf16.msra.mxu0 %v473
        %493 = vmatprep.subr.bf16.mxu0 0
        %494 = vmatpush1.bf16.msra.mxu0 %v472
        %495 = vmatprep.subr.bf16.mxu0 0
        %496 = vmatpush1.bf16.msra.mxu0 %v471
        %497 = vmatprep.subr.bf16.mxu0 0
        %498 = vmatpush1.bf16.msra.mxu0 %v470
        %499 = vmatprep.subr.bf16.mxu0 0
        %500 = vmatpush1.bf16.msra.mxu0 %v469
        %501 = vmatprep.subr.bf16.mxu0 0
        %502 = vmatpush2.bf16.msra.mxu0 0
        %503 = vmatprep.subr.bf16.mxu0 0
        %504 = vmatpush2.bf16.msra.mxu0 0
        %505 = vmatprep.subr.bf16.mxu0 0
        %506 = vmatpush2.bf16.msra.mxu0 0
        %507 = vmatprep.subr.bf16.mxu0 0
        %508 = vmatpush2.bf16.msra.mxu0 0
        %509 = vmatprep.subr.bf16.mxu0 0
        %510 = vmatpush2.bf16.msra.mxu0 0
        %511 = vmatprep.subr.bf16.mxu0 0
        %512 = vmatpush2.bf16.msra.mxu0 0
        %513 = vmatprep.subr.bf16.mxu0 0
        %514 = vmatpush2.bf16.msra.mxu0 0
        %515 = vmatprep.subr.bf16.mxu0 0
        %516 = vmatpush2.bf16.msra.mxu0 0
        %517 = vmatprep.mubr.bf16.mxu0 0
        %518 = vmatmul.mubr.bf16.gmra.mxu0 %v413
        %v519 = vpop.f32.mrf.mxu0
        %v520 = vadd.f32 %v435, %v519
        %v521 = vpop.f32.mrf.mxu0
        %v522 = vpop.f32.mrf.mxu0
        %v523 = vpop.f32.mrf.mxu0
        %524 = vdwg.mxu0
        %525 = vst.msk [vmem:[%s269] sm:$0xff] %vm300, %v520
        %s526 = sand.u32 %s181, 1
        %s527 = scalar_lea.sflag [#allocation3], %s526
        %s528 = sand.u32 %s181, 1
        %s529 = smul.addr %s528, 8
        %s530 = scalar_lea.vmem [#allocation2], %s529
        // Predicated region
        $region49: #{tpu_custom_call.1} parent=47 // pred_check
          %p531 = pneg %p191
        $region50: #{tpu_custom_call.1} parent=47 // pred_check_branch
          %533 = sbr.rel (%p531) target = $region52
        $region51: #{tpu_custom_call.1} parent=47 // pred_region
          %s535 = ssub.s32 128, 128
          %536 = vsyncadd %s527, %s535
          %s537 = smul.addr %s21, 128
          %s538 = scalar_lea.hbm %s7, %s537
          %s540 = sshll.u32 %s530, 4
          %s541 = int_to_ptr.vmem [resolvable:$true] %s540
          %543 = dma.vmem_to_hbm [thread:$0]  %s541, 128, %s538, %s527
        $region52: #{tpu_custom_call.1} parent=47 // pred_fallthru
          _
      $region48: #{tpu_custom_call.1} parent=5 // pred_fallthru
        _
      %p544 = scmp.le.s32.totalorder 2, %s16
      // Predicated region
      $region53: #{tpu_custom_call.1} parent=5 // pred_check
        %p545 = pneg %p544
      $region54: #{tpu_custom_call.1} parent=5 // pred_check_branch
        %547 = sbr.rel (%p545) target = $region56
      $region55: #{tpu_custom_call.1} parent=5 // pred_region
        %s548 = ssub.s32 %s16, 2
        // Predicated region
        $region57: #{tpu_custom_call.1} parent=55 // pred_check
          %p549 = pneg %p197
        $region58: #{tpu_custom_call.1} parent=55 // pred_check_branch
          %551 = sbr.rel (%p549) target = $region60
        $region59: #{tpu_custom_call.1} parent=55 // pred_region
          %s552 = sand.u32 %s182, 1
          %s553 = scalar_lea.sflag [#allocation3], %s552
          %s554 = sand.u32 %s182, 1
          %s555 = smul.addr %s554, 8
          %s556 = scalar_lea.vmem [#allocation2], %s555
          %557 = dma.done %s553, 128
        $region60: #{tpu_custom_call.1} parent=55 // pred_fallthru
          _
      $region56: #{tpu_custom_call.1} parent=5 // pred_fallthru
        _
    $region6: #{tpu_custom_call.1} parent=1 // loop_footer
      %s20 = sadd.s32 1, %s16
    $region7: #{tpu_custom_call.1} parent=1 // loop_footer_branch
      %15 = sbr.rel target = $region3
    $region8: #{tpu_custom_call.1} parent=1 // loop_exit
      _
    %558 = vsyncpa [#allocation3], 1
    %s559 = scalar_lea.sflag [#allocation3], 1
    %560 = vsyncpa %s559, 1

// kernel: tpu_custom_call.1
$region0: #{tpu_custom_call.1}
  #allocation0 [shape = 'u32[]', space=smem, size = 0x4, offset = 0x4, fixed_abs, tag = 'smem constant byte address 0x4 - core index']
  #allocation1 [shape = 'u32[144,128]{1,0:T(1,128)}', space=vmem, size = 0x12000, scoped, tag = 'internal scratch']
  %s0 = inlined_call_operand.vmem [shape: f32[16,32], index: 0, kind: input, shape index: {}]
  %s1 = inlined_call_operand.vmem [shape: bf16[32,128], index: 1, kind: input, shape index: {}]
  %s2 = inlined_call_operand.vmem [shape: bf16[32,128], index: 2, kind: input, shape index: {}]
  %s3 = inlined_call_operand.vmem [shape: f32[1,128], index: 3, kind: input, shape index: {}]
  %s4 = inlined_call_operand.vmem [shape: f32[1,128], index: 4, kind: input, shape index: {}]
  %s5 = inlined_call_operand.vmem [shape: bf16[128,32], index: 5, kind: input, shape index: {}]
  %s6 = inlined_call_operand.vmem [shape: f32[1,32], index: 6, kind: input, shape index: {}]
  %s7 = inlined_call_operand.hbm [shape: f32[16,32], index: 7, kind: output, shape index: {}]
  %s8 = sld [smem:[#allocation0]]
  $region61: #{tpu_custom_call.1} parent=0
    _
  %s10 = ssub.s32 1, %s8
  %s11 = scalar_select 0, %s10, %s8
  $region1: #{tpu_custom_call.1} parent=0
    #allocation2 [shape = 'u8[8192]{0}', space=vmem, size = 0x2000, scoped, tag = 'output window, operand 0']
    #allocation3 [shape = 's32[2]{0}', space=sflag, size = 0x8, scoped, tag = 'scoped memory for tpu_custom_call.1']
    %12 = vsyncpa [#allocation3], 0
    %s13 = scalar_lea.sflag [#allocation3], 1
    %14 = vsyncpa %s13, 0
    loop: start=0, step=1, limit=4
    $region2: #{tpu_custom_call.1} parent=1 // loop_pre_header
      _
    $region3: #{tpu_custom_call.1} parent=1 // loop_header
      %s16 = sphi 0, %s20
      %p17 = scmp.ge.s32.totalorder %s16, 4
      %s26 = sphi 0, %s28
      %s29 = sphi 0, %s26
      %s30 = sphi 0, %s29
      %s46 = sphi 0, %s30
      %s50 = sphi 0, %s50
      %s52 = sphi 0, %s50
      %s53 = sphi 0, %s52
      %s67 = sphi 0, %s53
      %s71 = sphi 0, %s71
      %s73 = sphi 0, %s71
      %s74 = sphi 0, %s73
      %s88 = sphi 0, %s74
      %s92 = sphi 0, %s92
      %s94 = sphi 0, %s92
      %s95 = sphi 0, %s94
      %s109 = sphi 0, %s95
      %s113 = sphi 0, %s113
      %s115 = sphi 0, %s113
      %s116 = sphi 0, %s115
      %s130 = sphi 0, %s116
      %s134 = sphi 0, %s134
      %s136 = sphi 0, %s134
      %s137 = sphi 0, %s136
      %s151 = sphi 0, %s137
      %s155 = sphi 0, %s155
      %s157 = sphi 0, %s155
      %s158 = sphi 0, %s157
      %s172 = sphi 0, %s158
      %s178 = sphi 0, %s180
      %s181 = sphi 0, %s178
      %s182 = sphi 0, %s181
      %s198 = sphi 0, %s182
    $region4: #{tpu_custom_call.1} parent=1 // loop_header_branch
      %19 = sbr.rel (%p17) target = $region8
    $region5: #{tpu_custom_call.1} parent=1 // loop_body
      %s21 = ssub.s32 %s16, 1
      %s22 = ssub.s32 %s16, 2
      %s23 = sadd.s32 %s16, 1
      %s24 = ssub.s32 %s16, %s23
      %p25 = scmp.eq.s32.totalorder %s24, 0
      %s27 = sadd.s32 %s26, 1
      %s28 = scalar_select %p25, %s26, %s27
      %p31 = pneg %p25
      %p32 = scmp.eq.s32.totalorder %s16, 1
      %p33 = por %p31, %p32
      %p34 = scmp.ne.s32.totalorder %s26, %s29
      %p35 = scmp.eq.s32.totalorder %s16, 0
      %p36 = por %p34, %p35
      %p37 = scmp.ne.s32.totalorder %s26, %s29
      %p38 = scmp.eq.s32.totalorder %s21, 1
      %p39 = por %p37, %p38
      %p40 = scmp.ne.s32.totalorder %s29, %s30
      %p41 = scmp.eq.s32.totalorder %s21, 0
      %p42 = por %p40, %p41
      %p43 = scmp.ne.s32.totalorder %s29, %s30
      %p44 = scmp.eq.s32.totalorder %s22, 1
      %p45 = por %p43, %p44
      %p47 = scmp.ne.s32.totalorder %s30, %s46
      %p48 = scmp.eq.s32.totalorder %s22, 0
      %p49 = por %p47, %p48
      %s51 = sadd.s32 %s50, 1
      %p54 = scmp.eq.s32.totalorder %s16, 1
      %p55 = scmp.ne.s32.totalorder %s50, %s52
      %p56 = scmp.eq.s32.totalorder %s16, 0
      %p57 = por %p55, %p56
      %p58 = scmp.ne.s32.totalorder %s50, %s52
      %p59 = scmp.eq.s32.totalorder %s21, 1
      %p60 = por %p58, %p59
      %p61 = scmp.ne.s32.totalorder %s52, %s53
      %p62 = scmp.eq.s32.totalorder %s21, 0
      %p63 = por %p61, %p62
      %p64 = scmp.ne.s32.totalorder %s52, %s53
      %p65 = scmp.eq.s32.totalorder %s22, 1
      %p66 = por %p64, %p65
      %p68 = scmp.ne.s32.totalorder %s53, %s67
      %p69 = scmp.eq.s32.totalorder %s22, 0
      %p70 = por %p68, %p69
      %s72 = sadd.s32 %s71, 1
      %p75 = scmp.eq.s32.totalorder %s16, 1
      %p76 = scmp.ne.s32.totalorder %s71, %s73
      %p77 = scmp.eq.s32.totalorder %s16, 0
      %p78 = por %p76, %p77
      %p79 = scmp.ne.s32.totalorder %s71, %s73
      %p80 = scmp.eq.s32.totalorder %s21, 1
      %p81 = por %p79, %p80
      %p82 = scmp.ne.s32.totalorder %s73, %s74
      %p83 = scmp.eq.s32.totalorder %s21, 0
      %p84 = por %p82, %p83
      %p85 = scmp.ne.s32.totalorder %s73, %s74
      %p86 = scmp.eq.s32.totalorder %s22, 1
      %p87 = por %p85, %p86
      %p89 = scmp.ne.s32.totalorder %s74, %s88
      %p90 = scmp.eq.s32.totalorder %s22, 0
      %p91 = por %p89, %p90
      %s93 = sadd.s32 %s92, 1
      %p96 = scmp.eq.s32.totalorder %s16, 1
      %p97 = scmp.ne.s32.totalorder %s92, %s94
      %p98 = scmp.eq.s32.totalorder %s16, 0
      %p99 = por %p97, %p98
      %p100 = scmp.ne.s32.totalorder %s92, %s94
      %p101 = scmp.eq.s32.totalorder %s21, 1
      %p102 = por %p100, %p101
      %p103 = scmp.ne.s32.totalorder %s94, %s95
      %p104 = scmp.eq.s32.totalorder %s21, 0
      %p105 = por %p103, %p104
      %p106 = scmp.ne.s32.totalorder %s94, %s95
      %p107 = scmp.eq.s32.totalorder %s22, 1
      %p108 = por %p106, %p107
      %p110 = scmp.ne.s32.totalorder %s95, %s109
      %p111 = scmp.eq.s32.totalorder %s22, 0
      %p112 = por %p110, %p111
      %s114 = sadd.s32 %s113, 1
      %p117 = scmp.eq.s32.totalorder %s16, 1
      %p118 = scmp.ne.s32.totalorder %s113, %s115
      %p119 = scmp.eq.s32.totalorder %s16, 0
      %p120 = por %p118, %p119
      %p121 = scmp.ne.s32.totalorder %s113, %s115
      %p122 = scmp.eq.s32.totalorder %s21, 1
      %p123 = por %p121, %p122
      %p124 = scmp.ne.s32.totalorder %s115, %s116
      %p125 = scmp.eq.s32.totalorder %s21, 0
      %p126 = por %p124, %p125
      %p127 = scmp.ne.s32.totalorder %s115, %s116
      %p128 = scmp.eq.s32.totalorder %s22, 1
      %p129 = por %p127, %p128
      %p131 = scmp.ne.s32.totalorder %s116, %s130
      %p132 = scmp.eq.s32.totalorder %s22, 0
      %p133 = por %p131, %p132
      %s135 = sadd.s32 %s134, 1
      %p138 = scmp.eq.s32.totalorder %s16, 1
      %p139 = scmp.ne.s32.totalorder %s134, %s136
      %p140 = scmp.eq.s32.totalorder %s16, 0
      %p141 = por %p139, %p140
      %p142 = scmp.ne.s32.totalorder %s134, %s136
      %p143 = scmp.eq.s32.totalorder %s21, 1
      %p144 = por %p142, %p143
      %p145 = scmp.ne.s32.totalorder %s136, %s137
      %p146 = scmp.eq.s32.totalorder %s21, 0
      %p147 = por %p145, %p146
      %p148 = scmp.ne.s32.totalorder %s136, %s137
      %p149 = scmp.eq.s32.totalorder %s22, 1
      %p150 = por %p148, %p149
      %p152 = scmp.ne.s32.totalorder %s137, %s151
      %p153 = scmp.eq.s32.totalorder %s22, 0
      %p154 = por %p152, %p153
      %s156 = sadd.s32 %s155, 1
      %p159 = scmp.eq.s32.totalorder %s16, 1
      %p160 = scmp.ne.s32.totalorder %s155, %s157
      %p161 = scmp.eq.s32.totalorder %s16, 0
      %p162 = por %p160, %p161
      %p163 = scmp.ne.s32.totalorder %s155, %s157
      %p164 = scmp.eq.s32.totalorder %s21, 1
      %p165 = por %p163, %p164
      %p166 = scmp.ne.s32.totalorder %s157, %s158
      %p167 = scmp.eq.s32.totalorder %s21, 0
      %p168 = por %p166, %p167
      %p169 = scmp.ne.s32.totalorder %s157, %s158
      %p170 = scmp.eq.s32.totalorder %s22, 1
      %p171 = por %p169, %p170
      %p173 = scmp.ne.s32.totalorder %s158, %s172
      %p174 = scmp.eq.s32.totalorder %s22, 0
      %p175 = por %p173, %p174
      %s176 = ssub.s32 %s16, %s23
      %p177 = scmp.eq.s32.totalorder %s176, 0
      %s179 = sadd.s32 %s178, 1
      %s180 = scalar_select %p177, %s178, %s179
      %p183 = pneg %p177
      %p184 = scmp.eq.s32.totalorder %s16, 1
      %p185 = por %p183, %p184
      %p186 = scmp.ne.s32.totalorder %s178, %s181
      %p187 = scmp.eq.s32.totalorder %s16, 0
      %p188 = por %p186, %p187
      %p189 = scmp.ne.s32.totalorder %s178, %s181
      %p190 = scmp.eq.s32.totalorder %s21, 1
      %p191 = por %p189, %p190
      %p192 = scmp.ne.s32.totalorder %s181, %s182
      %p193 = scmp.eq.s32.totalorder %s21, 0
      %p194 = por %p192, %p193
      %p195 = scmp.ne.s32.totalorder %s181, %s182
      %p196 = scmp.eq.s32.totalorder %s22, 1
      %p197 = por %p195, %p196
      %p199 = scmp.ne.s32.totalorder %s182, %s198
      %p200 = scmp.eq.s32.totalorder %s22, 0
      %p201 = por %p199, %p200
      %p202 = scmp.le.s32.totalorder 1, %s16
      %p203 = scmp.lt.s32.totalorder %s16, 3
      %p204 = pnand %p202, %p203
      %p205 = pneg %p204
      // Predicated region
      $region9: #{tpu_custom_call.1} parent=5 // pred_check
        _
      $region10: #{tpu_custom_call.1} parent=5 // pred_check_branch
        %207 = sbr.rel (%p204) target = $region12
      $region11: #{tpu_custom_call.1} parent=5 // pred_region
        %s208 = ssub.s32 %s16, 1
        // Predicated region
        $region13: #{tpu_custom_call.1} parent=11 // pred_check
          %p209 = pneg %p63
        $region14: #{tpu_custom_call.1} parent=11 // pred_check_branch
          %211 = sbr.rel (%p209) target = $region16
        $region15: #{tpu_custom_call.1} parent=11 // pred_region
          _
        $region16: #{tpu_custom_call.1} parent=11 // pred_fallthru
          _
        // Predicated region
        $region17: #{tpu_custom_call.1} parent=11 // pred_check
          %p212 = pneg %p84
        $region18: #{tpu_custom_call.1} parent=11 // pred_check_branch
          %214 = sbr.rel (%p212) target = $region20
        $region19: #{tpu_custom_call.1} parent=11 // pred_region
          _
        $region20: #{tpu_custom_call.1} parent=11 // pred_fallthru
          _
        // Predicated region
        $region21: #{tpu_custom_call.1} parent=11 // pred_check
          %p215 = pneg %p105
        $region22: #{tpu_custom_call.1} parent=11 // pred_check_branch
          %217 = sbr.rel (%p215) target = $region24
        $region23: #{tpu_custom_call.1} parent=11 // pred_region
          _
        $region24: #{tpu_custom_call.1} parent=11 // pred_fallthru
          _
        // Predicated region
        $region25: #{tpu_custom_call.1} parent=11 // pred_check
          %p218 = pneg %p126
        $region26: #{tpu_custom_call.1} parent=11 // pred_check_branch
          %220 = sbr.rel (%p218) target = $region28
        $region27: #{tpu_custom_call.1} parent=11 // pred_region
          _
        $region28: #{tpu_custom_call.1} parent=11 // pred_fallthru
          _
        // Predicated region
        $region29: #{tpu_custom_call.1} parent=11 // pred_check
          %p221 = pneg %p147
        $region30: #{tpu_custom_call.1} parent=11 // pred_check_branch
          %223 = sbr.rel (%p221) target = $region32
        $region31: #{tpu_custom_call.1} parent=11 // pred_region
          _
        $region32: #{tpu_custom_call.1} parent=11 // pred_fallthru
          _
        // Predicated region
        $region33: #{tpu_custom_call.1} parent=11 // pred_check
          %p224 = pneg %p168
        $region34: #{tpu_custom_call.1} parent=11 // pred_check_branch
          %226 = sbr.rel (%p224) target = $region36
        $region35: #{tpu_custom_call.1} parent=11 // pred_region
          _
        $region36: #{tpu_custom_call.1} parent=11 // pred_fallthru
          _
      $region12: #{tpu_custom_call.1} parent=5 // pred_fallthru
        _
      %p227 = scmp.lt.s32.totalorder %s16, 2
      // Predicated region
      $region37: #{tpu_custom_call.1} parent=5 // pred_check
        %p228 = pneg %p227
      $region38: #{tpu_custom_call.1} parent=5 // pred_check_branch
        %230 = sbr.rel (%p228) target = $region40
      $region39: #{tpu_custom_call.1} parent=5 // pred_region
        // Predicated region
        $region41: #{tpu_custom_call.1} parent=39 // pred_check
          %p231 = pneg %p36
        $region42: #{tpu_custom_call.1} parent=39 // pred_check_branch
          %233 = sbr.rel (%p231) target = $region44
        $region43: #{tpu_custom_call.1} parent=39 // pred_region
          %p234 = scmp.lt.s32.totalorder %s16, 1
          %s235 = scalar_select %p234, %s16, 1
          %s236 = smul.addr %s235, 8
          %s237 = scalar_lea.vmem %s0, %s236
        $region44: #{tpu_custom_call.1} parent=39 // pred_fallthru
          _
      $region40: #{tpu_custom_call.1} parent=5 // pred_fallthru
        _
      %p238 = scmp.le.s32.totalorder 1, %s16
      %p239 = scmp.lt.s32.totalorder %s16, 3
      %p240 = pnand %p238, %p239
      %p241 = pneg %p240
      // Predicated region
      $region45: #{tpu_custom_call.1} parent=5 // pred_check
        _
      $region46: #{tpu_custom_call.1} parent=5 // pred_check_branch
        %243 = sbr.rel (%p240) target = $region48
      $region47: #{tpu_custom_call.1} parent=5 // pred_region
        %s244 = ssub.s32 %s16, 1
        %p245 = scmp.lt.s32.totalorder %s21, 1
        %s246 = scalar_select %p245, %s21, 1
        %s247 = smul.addr %s246, 8
        %s248 = scalar_lea.vmem %s0, %s247
        %p249 = pneg %p42
        %p250 = pneg %p39
        %p251 = pneg %p63
        %p252 = pneg %p60
        %p253 = pneg %p84
        %p254 = pneg %p81
        %p255 = pneg %p105
        %p256 = pneg %p102
        %p257 = pneg %p126
        %p258 = pneg %p123
        %p259 = pneg %p147
        %p260 = pneg %p144
        %p261 = pneg %p168
        %p262 = pneg %p165
        %p263 = pneg %p194
        %p264 = pneg %p191
        %s265 = sand.u32 %s181, 1
        %s266 = scalar_lea.sflag [#allocation3], %s265
        %s267 = sand.u32 %s181, 1
        %s268 = smul.addr %s267, 8
        %s269 = scalar_lea.vmem [#allocation2], %s268
        %p270 = scmp.lt.s32.totalorder %s21, 1
        %s271 = scalar_select %p270, %s21, 1
        %s272 = smul.addr %s271, 8
        %s273 = scalar_lea.vmem %s0, %s272
        %v275 = vld [vmem:[%s273] sm:$0xff]
        %v276 = vpack.c.bf16 %v275, %v275
        %v277 = vld [vmem:[%s1] sm:$0xf]
        %v278 = vld [vmem:[%s1 + $0x4] sm:$0xf]
        %v279 = vld [vmem:[%s1 + $0x8] sm:$0xf]
        %v280 = vld [vmem:[%s1 + $0xc] sm:$0xf]
        %v281 = vld [vmem:[%s3] sm:$0x1]
        %v283 = vlaneseq
        %v284 = vshrl.u32 %v283, 7
        %v285 = vsub.s32 0, %v284
        %v286 = vrot.slane %v281, %v285
        %v292 = vunpack.c.l.b16 %v277
        %v293 = vunpack.c.l.b16 %v278
        %v294 = vunpack.c.l.b16 %v279
        %v295 = vunpack.c.l.b16 %v280
        %v296 = vpack.c.b16 %v293, %v292
        %v297 = vpack.c.b16 %v295, %v294
        %vm300 = vcmask 261120
        %v302 = vsel %vm300, %v276, 0
        %304 = vmatprep.subr.bf16.mxu0 0
        %305 = vmatpush1.bf16.msra.mxu0 0
        %306 = vmatprep.subr.bf16.mxu0 0
        %307 = vmatpush1.bf16.msra.mxu0 0
        %308 = vmatprep.subr.bf16.mxu0 0
        %309 = vmatpush1.bf16.msra.mxu0 0
        %310 = vmatprep.subr.bf16.mxu0 0
        %311 = vmatpush1.bf16.msra.mxu0 0
        %312 = vmatprep.subr.bf16.mxu0 0
        %313 = vmatpush1.bf16.msra.mxu0 0
        %314 = vmatprep.subr.bf16.mxu0 0
        %315 = vmatpush1.bf16.msra.mxu0 0
        %316 = vmatprep.subr.bf16.mxu0 0
        %317 = vmatpush1.bf16.msra.mxu0 %v297
        %318 = vmatprep.subr.bf16.mxu0 0
        %319 = vmatpush1.bf16.msra.mxu0 %v296
        %320 = vmatprep.subr.bf16.mxu0 0
        %321 = vmatpush2.bf16.msra.mxu0 0
        %322 = vmatprep.subr.bf16.mxu0 0
        %323 = vmatpush2.bf16.msra.mxu0 0
        %324 = vmatprep.subr.bf16.mxu0 0
        %325 = vmatpush2.bf16.msra.mxu0 0
        %326 = vmatprep.subr.bf16.mxu0 0
        %327 = vmatpush2.bf16.msra.mxu0 0
        %328 = vmatprep.subr.bf16.mxu0 0
        %329 = vmatpush2.bf16.msra.mxu0 0
        %330 = vmatprep.subr.bf16.mxu0 0
        %331 = vmatpush2.bf16.msra.mxu0 0
        %332 = vmatprep.subr.bf16.mxu0 0
        %333 = vmatpush2.bf16.msra.mxu0 0
        %334 = vmatprep.subr.bf16.mxu0 0
        %335 = vmatpush2.bf16.msra.mxu0 0
        %336 = vmatprep.mubr.bf16.mxu0 0
        %337 = vmatmul.mubr.bf16.gmra.mxu0 %v302
        %v338 = vpop.f32.mrf.mxu0
        %v339 = vadd.f32 %v286, %v338
        %v340 = vpop.f32.mrf.mxu0
        %v341 = vpop.f32.mrf.mxu0
        %v342 = vpop.f32.mrf.mxu0
        %343 = vdwg.mxu0
        %v344 = vld [vmem:[%s2] sm:$0xf]
        %v345 = vld [vmem:[%s2 + $0x4] sm:$0xf]
        %v346 = vld [vmem:[%s2 + $0x8] sm:$0xf]
        %v347 = vld [vmem:[%s2 + $0xc] sm:$0xf]
        %v348 = vld [vmem:[%s4] sm:$0x1]
        %v350 = vlaneseq
        %v351 = vshrl.u32 %v350, 7
        %v352 = vsub.s32 0, %v351
        %v353 = vrot.slane %v348, %v352
        %v359 = vunpack.c.l.b16 %v344
        %v360 = vunpack.c.l.b16 %v345
        %v361 = vunpack.c.l.b16 %v346
        %v362 = vunpack.c.l.b16 %v347
        %v363 = vpack.c.b16 %v360, %v359
        %v364 = vpack.c.b16 %v362, %v361
        %367 = vmatprep.subr.bf16.mxu0 0
        %368 = vmatpush1.bf16.msra.mxu0 0
        %369 = vmatprep.subr.bf16.mxu0 0
        %370 = vmatpush1.bf16.msra.mxu0 0
        %371 = vmatprep.subr.bf16.mxu0 0
        %372 = vmatpush1.bf16.msra.mxu0 0
        %373 = vmatprep.subr.bf16.mxu0 0
        %374 = vmatpush1.bf16.msra.mxu0 0
        %375 = vmatprep.subr.bf16.mxu0 0
        %376 = vmatpush1.bf16.msra.mxu0 0
        %377 = vmatprep.subr.bf16.mxu0 0
        %378 = vmatpush1.bf16.msra.mxu0 0
        %379 = vmatprep.subr.bf16.mxu0 0
        %380 = vmatpush1.bf16.msra.mxu0 %v364
        %381 = vmatprep.subr.bf16.mxu0 0
        %382 = vmatpush1.bf16.msra.mxu0 %v363
        %383 = vmatprep.subr.bf16.mxu0 0
        %384 = vmatpush2.bf16.msra.mxu0 0
        %385 = vmatprep.subr.bf16.mxu0 0
        %386 = vmatpush2.bf16.msra.mxu0 0
        %387 = vmatprep.subr.bf16.mxu0 0
        %388 = vmatpush2.bf16.msra.mxu0 0
        %389 = vmatprep.subr.bf16.mxu0 0
        %390 = vmatpush2.bf16.msra.mxu0 0
        %391 = vmatprep.subr.bf16.mxu0 0
        %392 = vmatpush2.bf16.msra.mxu0 0
        %393 = vmatprep.subr.bf16.mxu0 0
        %394 = vmatpush2.bf16.msra.mxu0 0
        %395 = vmatprep.subr.bf16.mxu0 0
        %396 = vmatpush2.bf16.msra.mxu0 0
        %397 = vmatprep.subr.bf16.mxu0 0
        %398 = vmatpush2.bf16.msra.mxu0 0
        %399 = vmatprep.mubr.bf16.mxu0 0
        %400 = vmatmul.mubr.bf16.gmra.mxu0 %v302
        %v401 = vpop.f32.mrf.mxu0
        %v402 = vadd.f32 %v353, %v401
        %v403 = vpop.f32.mrf.mxu0
        %v404 = vpop.f32.mrf.mxu0
        %v405 = vpop.f32.mrf.mxu0
        %406 = vdwg.mxu0
        %v407 = vmul.f32 %v402, 0.5
        %v408 = vmul.f32 %v402, 0.70710677
        %v409 = verf.f32.pop %v408
        %v410 = vadd.f32 %v409, 1.0
        %v411 = vmul.f32 %v407, %v410
        %v412 = vmul.f32 %v339, %v411
        %v413 = vpack.c.bf16 %v412, %v412
        %v414 = vld [vmem:[%s5] sm:$0xf]
        %v415 = vld [vmem:[%s5 + $0x4] sm:$0xf]
        %v416 = vld [vmem:[%s5 + $0x8] sm:$0xf]
        %v417 = vld [vmem:[%s5 + $0xc] sm:$0xf]
        %v418 = vld [vmem:[%s5 + $0x10] sm:$0xf]
        %v419 = vld [vmem:[%s5 + $0x14] sm:$0xf]
        %v420 = vld [vmem:[%s5 + $0x18] sm:$0xf]
        %v421 = vld [vmem:[%s5 + $0x1c] sm:$0xf]
        %v422 = vld [vmem:[%s5 + $0x20] sm:$0xf]
        %v423 = vld [vmem:[%s5 + $0x24] sm:$0xf]
        %v424 = vld [vmem:[%s5 + $0x28] sm:$0xf]
        %v425 = vld [vmem:[%s5 + $0x2c] sm:$0xf]
        %v426 = vld [vmem:[%s5 + $0x30] sm:$0xf]
        %v427 = vld [vmem:[%s5 + $0x34] sm:$0xf]
        %v428 = vld [vmem:[%s5 + $0x38] sm:$0xf]
        %v429 = vld [vmem:[%s5 + $0x3c] sm:$0xf]
        %v430 = vld [vmem:[%s6] sm:$0x1]
        %v432 = vlaneseq
        %v433 = vshrl.u32 %v432, 7
        %v434 = vsub.s32 0, %v433
        %v435 = vrot.slane %v430, %v434
        %v453 = vunpack.c.l.b16 %v414
        %v454 = vunpack.c.l.b16 %v415
        %v455 = vunpack.c.l.b16 %v416
        %v456 = vunpack.c.l.b16 %v417
        %v457 = vunpack.c.l.b16 %v418
        %v458 = vunpack.c.l.b16 %v419
        %v459 = vunpack.c.l.b16 %v420
        %v460 = vunpack.c.l.b16 %v421
        %v461 = vunpack.c.l.b16 %v422
        %v462 = vunpack.c.l.b16 %v423
        %v463 = vunpack.c.l.b16 %v424
        %v464 = vunpack.c.l.b16 %v425
        %v465 = vunpack.c.l.b16 %v426
        %v466 = vunpack.c.l.b16 %v427
        %v467 = vunpack.c.l.b16 %v428
        %v468 = vunpack.c.l.b16 %v429
        %v469 = vpack.c.b16 %v454, %v453
        %v470 = vpack.c.b16 %v456, %v455
        %v471 = vpack.c.b16 %v458, %v457
        %v472 = vpack.c.b16 %v460, %v459
        %v473 = vpack.c.b16 %v462, %v461
        %v474 = vpack.c.b16 %v464, %v463
        %v475 = vpack.c.b16 %v466, %v465
        %v476 = vpack.c.b16 %v468, %v467
        %485 = vmatprep.subr.bf16.mxu0 0
        %486 = vmatpush1.bf16.msra.mxu0 %v476
        %487 = vmatprep.subr.bf16.mxu0 0
        %488 = vmatpush1.bf16.msra.mxu0 %v475
        %489 = vmatprep.subr.bf16.mxu0 0
        %490 = vmatpush1.bf16.msra.mxu0 %v474
        %491 = vmatprep.subr.bf16.mxu0 0
        %492 = vmatpush1.bf16.msra.mxu0 %v473
        %493 = vmatprep.subr.bf16.mxu0 0
        %494 = vmatpush1.bf16.msra.mxu0 %v472
        %495 = vmatprep.subr.bf16.mxu0 0
        %496 = vmatpush1.bf16.msra.mxu0 %v471
        %497 = vmatprep.subr.bf16.mxu0 0
        %498 = vmatpush1.bf16.msra.mxu0 %v470
        %499 = vmatprep.subr.bf16.mxu0 0
        %500 = vmatpush1.bf16.msra.mxu0 %v469
        %501 = vmatprep.subr.bf16.mxu0 0
        %502 = vmatpush2.bf16.msra.mxu0 0
        %503 = vmatprep.subr.bf16.mxu0 0
        %504 = vmatpush2.bf16.msra.mxu0 0
        %505 = vmatprep.subr.bf16.mxu0 0
        %506 = vmatpush2.bf16.msra.mxu0 0
        %507 = vmatprep.subr.bf16.mxu0 0
        %508 = vmatpush2.bf16.msra.mxu0 0
        %509 = vmatprep.subr.bf16.mxu0 0
        %510 = vmatpush2.bf16.msra.mxu0 0
        %511 = vmatprep.subr.bf16.mxu0 0
        %512 = vmatpush2.bf16.msra.mxu0 0
        %513 = vmatprep.subr.bf16.mxu0 0
        %514 = vmatpush2.bf16.msra.mxu0 0
        %515 = vmatprep.subr.bf16.mxu0 0
        %516 = vmatpush2.bf16.msra.mxu0 0
        %517 = vmatprep.mubr.bf16.mxu0 0
        %518 = vmatmul.mubr.bf16.gmra.mxu0 %v413
        %v519 = vpop.f32.mrf.mxu0
        %v520 = vadd.f32 %v435, %v519
        %v521 = vpop.f32.mrf.mxu0
        %v522 = vpop.f32.mrf.mxu0
        %v523 = vpop.f32.mrf.mxu0
        %524 = vdwg.mxu0
        %525 = vst.msk [vmem:[%s269] sm:$0xff] %vm300, %v520
        %s526 = sand.u32 %s181, 1
        %s527 = scalar_lea.sflag [#allocation3], %s526
        %s528 = sand.u32 %s181, 1
        %s529 = smul.addr %s528, 8
        %s530 = scalar_lea.vmem [#allocation2], %s529
        // Predicated region
        $region49: #{tpu_custom_call.1} parent=47 // pred_check
          %p531 = pneg %p191
        $region50: #{tpu_custom_call.1} parent=47 // pred_check_branch
          %533 = sbr.rel (%p531) target = $region52
        $region51: #{tpu_custom_call.1} parent=47 // pred_region
          %s535 = ssub.s32 128, 128
          %536 = vsyncadd %s527, %s535
          %s537 = smul.addr %s21, 128
          %s538 = scalar_lea.hbm %s7, %s537
          %s540 = sshll.u32 %s530, 4
          %s541 = int_to_ptr.vmem [resolvable:$true] %s540
          %543 = dma.vmem_to_hbm [thread:$0]  %s541, 128, %s538, %s527
        $region52: #{tpu_custom_call.1} parent=47 // pred_fallthru
          _
      $region48: #{tpu_custom_call.1} parent=5 // pred_fallthru
        _
      %p544 = scmp.le.s32.totalorder 2, %s16
      // Predicated region
      $region53: #{tpu_custom_call.1} parent=5 // pred_check
        %p545 = pneg %p544
      $region54: #{tpu_custom_call.1} parent=5 // pred_check_branch
        %547 = sbr.rel (%p545) target = $region56
      $region55: #{tpu_custom_call.1} parent=5 // pred_region
        %s548 = ssub.s32 %s16, 2
        // Predicated region
        $region57: #{tpu_custom_call.1} parent=55 // pred_check
          %p549 = pneg %p197
        $region58: #{tpu_custom_call.1} parent=55 // pred_check_branch
          %551 = sbr.rel (%p549) target = $region60
        $region59: #{tpu_custom_call.1} parent=55 // pred_region
          %s552 = sand.u32 %s182, 1
          %s553 = scalar_lea.sflag [#allocation3], %s552
          %s554 = sand.u32 %s182, 1
          %s555 = smul.addr %s554, 8
          %s556 = scalar_lea.vmem [#allocation2], %s555
          %557 = dma.done %s553, 128
        $region60: #{tpu_custom_call.1} parent=55 // pred_fallthru
          _
      $region56: #{tpu_custom_call.1} parent=5 // pred_fallthru
        _
    $region6: #{tpu_custom_call.1} parent=1 // loop_footer
      %s20 = sadd.s32 1, %s16
    $region7: #{tpu_custom_call.1} parent=1 // loop_footer_branch
      %15 = sbr.rel target = $region3
    $region8: #{tpu_custom_call.1} parent=1 // loop_exit
      _
    %558 = vsyncpa [#allocation3], 1
    %s559 = scalar_lea.sflag [#allocation3], 1
    %560 = vsyncpa %s559, 1

</llo_original>
